<compile_context>
chip_gen: v7x
topology: tpu7x:2x2x1
jax: 0.10.0
libtpu: 0.0.40
codegen_flags: <defaults>
</compile_context>

<pallas_src>
import functools

import jax
import jax.numpy as jnp
from jax.experimental import pallas as pl
from jax.experimental.pallas import tpu as pltpu


def _round_up(x, m):
    return ((x + m - 1) // m) * m


# ----------------------------------------------------------------------------
# Pallas kernel: DMA row gather + fused [tag|class] head + log_softmax
# ----------------------------------------------------------------------------
def fused_joint_head_kernel(num_word_blocks,   # static: # of word-row blocks
                            idx_ref,           # SMEM (R_pad,) int32: src row per dst row (-1 = pad)
                            valid_ref,         # (tm, 1) f32: 1.0 real row / 0.0 padded row
                            top_hbm,           # (BT, H) f32 in HBM: flattened sub-token hiddens
                            cls_hbm,           # (B,  H) f32 in HBM: CLS / pooler hiddens
                            w_ref,             # (H, NOUT) bf16: fused [tag | class] weights
                            b_ref,             # (1, NOUT) f32: fused bias
                            mask_ref,          # (2, NOUT) f32: additive column masks (tag row / cls row)
                            out_ref,           # (tm, NOUT) f32: log-probs
                            buf,               # scratch VMEM (tm, H) f32: gathered rows
                            sem):              # scratch DMA semaphore
    tm = buf.shape[0]
    i = pl.program_id(0)
    base = i * tm
    is_cls_block = i >= num_word_blocks

    # ---- data-dependent row gather: one small DMA per destination row ------
    def _start_all(src_hbm):
        def body(r, carry):
            idx = jnp.maximum(idx_ref[base + r], 0)   # -1 (pad) -> safe row 0; zeroed below
            pltpu.make_async_copy(src_hbm.at[pl.ds(idx, 1), :],
                                  buf.at[pl.ds(r, 1), :],
                                  sem).start()
            return carry
        jax.lax.fori_loop(0, tm, body, 0)

    @pl.when(is_cls_block)
    def _():
        _start_all(cls_hbm)

    @pl.when(jnp.logical_not(is_cls_block))
    def _():
        _start_all(top_hbm)

    # Wait for the tm row copies (each copy has the identical byte count, so a
    # same-shaped descriptor works regardless of which source it came from).
    def _wait(r, carry):
        pltpu.make_async_copy(top_hbm.at[pl.ds(0, 1), :],
                              buf.at[pl.ds(0, 1), :], sem).wait()
        return carry
    jax.lax.fori_loop(0, tm, _wait, 0)

    # ---- fused [tag | class] head: one lane-dense bf16 MXU matmul ----------
    g = (buf[...] * valid_ref[...]).astype(jnp.bfloat16)       # zero padded rows
    logits = jnp.dot(g, w_ref[...], preferred_element_type=jnp.float32) + b_ref[...]

    # Per-block column mask: word blocks see only tag columns, the CLS block
    # sees only class columns; masked columns get -1e30 so the lse is exact.
    colmask = jnp.where(is_cls_block, mask_ref[1:2, :], mask_ref[0:1, :])
    logits = logits + colmask

    # ---- log_softmax in f32 (exp / log run on the EUP slot) ----------------
    m = jnp.max(logits, axis=-1, keepdims=True)
    lse = m + jnp.log(jnp.sum(jnp.exp(logits - m), axis=-1, keepdims=True))
    out_ref[...] = logits - lse


# ----------------------------------------------------------------------------
# Hoisted, call-once head packing (weights are static across forwards).
# ----------------------------------------------------------------------------
def prepare_fused_head(w_tag, b_tag, w_cls, b_cls):
    H, n_tag = int(w_tag.shape[0]), int(w_tag.shape[1])
    n_cls = int(w_cls.shape[1])
    NOUT = _round_up(n_tag + n_cls, 128)          # single 128-wide lane-dense block

    w = jnp.zeros((H, NOUT), jnp.float32)
    w = w.at[:, :n_tag].set(w_tag.astype(jnp.float32))
    w = w.at[:, n_tag:n_tag + n_cls].set(w_cls.astype(jnp.float32))
    b = jnp.zeros((1, NOUT), jnp.float32)
    b = b.at[0, :n_tag].set(b_tag.astype(jnp.float32))
    b = b.at[0, n_tag:n_tag + n_cls].set(b_cls.astype(jnp.float32))

    col = jnp.arange(NOUT)
    neg = jnp.float32(-1e30)
    mask_tag = jnp.where(col < n_tag, jnp.float32(0.0), neg)
    mask_cls = jnp.where((col >= n_tag) & (col < n_tag + n_cls), jnp.float32(0.0), neg)
    masks = jnp.stack([mask_tag, mask_cls]).astype(jnp.float32)

    return {"w": w.astype(jnp.bfloat16), "b": b, "masks": masks,
            "n_tag": n_tag, "n_cls": n_cls, "nout": NOUT}


# ----------------------------------------------------------------------------
# Wrapper reproducing the PyTorch forward (eval mode) with the Pallas kernel.
# ----------------------------------------------------------------------------
def joint_slot_intent_forward(top_hiddens, cls_hidden, selects, copies,
                              lengths, head, *, tm=None):
    """top_hiddens: (B, T, H) f32, cls_hidden: (B, H) f32,
    selects/copies: flattened int32 index vectors (sum(lengths),).
    Returns (tag_scores (B, L, tagset_size), class_scores (B, class_size))."""
    B, T, H = top_hiddens.shape
    L = int(max(lengths))
    BL, BT = B * L, B * T
    n_tag, n_cls, NOUT = head["n_tag"], head["n_cls"], head["nout"]

    if tm is None:
        tm = min(512, max(8, _round_up(BL, 8)))
    tm = _round_up(int(tm), 8)

    # Row layout: word rows [0, BL) padded to a block boundary, then CLS rows.
    BL_pad = _round_up(BL, tm)
    num_word_blocks = BL_pad // tm
    num_cls_blocks = -(-B // tm)
    R_pad = BL_pad + num_cls_blocks * tm
    grid = (num_word_blocks + num_cls_blocks,)          # always >= 2 steps (v7x megacore)

    # Index plumbing only; the gather itself is done in-kernel via DMAs.
    dst_to_src = jnp.full((R_pad,), -1, jnp.int32)
    dst_to_src = dst_to_src.at[copies.astype(jnp.int32)].set(selects.astype(jnp.int32))
    dst_to_src = dst_to_src.at[BL_pad + jnp.arange(B, dtype=jnp.int32)].set(
        jnp.arange(B, dtype=jnp.int32))
    valid = (dst_to_src >= 0).astype(jnp.float32).reshape(R_pad, 1)

    top_flat = top_hiddens.reshape(BT, H).astype(jnp.float32)   # stays in HBM
    cls_src = cls_hidden.astype(jnp.float32)                    # stays in HBM

    kernel = functools.partial(fused_joint_head_kernel, num_word_blocks)

    out = pl.pallas_call(
        kernel,
        out_shape=jax.ShapeDtypeStruct((R_pad, NOUT), jnp.float32),
        grid_spec=pltpu.PrefetchScalarGridSpec(
            num_scalar_prefetch=1,
            grid=grid,
            in_specs=[
                pl.BlockSpec((tm, 1), lambda i, idx: (i, 0)),      # row validity mask
                pl.BlockSpec(memory_space=pl.ANY),                  # top hiddens (HBM)
                pl.BlockSpec(memory_space=pl.ANY),                  # cls hiddens (HBM)
                pl.BlockSpec((H, NOUT), lambda i, idx: (0, 0)),     # fused weights (resident)
                pl.BlockSpec((1, NOUT), lambda i, idx: (0, 0)),     # fused bias (resident)
                pl.BlockSpec((2, NOUT), lambda i, idx: (0, 0)),     # column masks (resident)
            ],
            out_specs=pl.BlockSpec((tm, NOUT), lambda i, idx: (i, 0)),
            scratch_shapes=[
                pltpu.VMEM((tm, H), jnp.float32),                   # gathered rows
                pltpu.SemaphoreType.DMA(()),                        # gather DMA semaphore
            ]),
        compiler_params=pltpu.CompilerParams(
            dimension_semantics=("parallel",)),
    )(dst_to_src, valid, top_flat, cls_src, head["w"], head["b"], head["masks"])

    tag_scores = out[:BL, :n_tag].reshape(B, L, n_tag)
    class_scores = out[BL_pad:BL_pad + B, n_tag:n_tag + n_cls]
    return tag_scores, class_scores


# ----------------------------------------------------------------------------
# Deterministic stand-in "pretrained model" (plain JAX glue).
# TODO(synk): real BERT encoder not reproduced; this only provides
#             (top_hiddens, cls_hidden) with the right shapes/semantics.
# ----------------------------------------------------------------------------
def standin_pretrained_model(tokens, segments, attention_mask, p):
    emb = p["tok_emb"][tokens] + p["seg_emb"][segments]             # (B, T, H)
    h = jnp.tanh(emb @ p["w_enc"] + p["b_enc"])                     # (B, T, H)
    h = h * attention_mask[..., None].astype(h.dtype)
    cls_hidden = jnp.tanh(h[:, 0, :] @ p["w_pool"] + p["b_pool"])   # (B, H)
    return h, cls_hidden


def reference_heads(top_hiddens, cls_hidden, selects, copies, lengths,
                    w_tag, b_tag, w_cls, b_cls):
    """Pure-JAX reference of the PyTorch head math (matmul operands rounded to
    bf16 to match the kernel's MXU operand precision; f32 accumulation)."""
    rd = lambda x: x.astype(jnp.bfloat16).astype(jnp.float32)
    B, T, H = top_hiddens.shape
    L = int(max(lengths))
    chosen = rd(top_hiddens).reshape(B * T, H)[selects]
    embeds = jnp.zeros((B * L, H), jnp.float32).at[copies].set(chosen)
    tag_space = embeds @ rd(w_tag) + b_tag
    tag_scores = jax.nn.log_softmax(tag_space, axis=-1).reshape(B, L, -1)
    cls_space = rd(cls_hidden) @ rd(w_cls) + b_cls
    class_scores = jax.nn.log_softmax(cls_space, axis=-1)
    return tag_scores, class_scores


if __name__ == "__main__":
    key = jax.random.PRNGKey(0)

    # Small shapes consistent with the module.
    B, T, H = 2, 10, 64            # batch, subword seq length, hidden_size
    vocab, n_seg = 50, 2
    tagset_size, class_size = 7, 5
    lengths = [6, 4]               # word-level lengths per sentence
    L = max(lengths)

    ks = jax.random.split(key, 12)

    # Stand-in pretrained-model parameters (deterministic).
    pm = {
        "tok_emb": jax.random.normal(ks[0], (vocab, H), jnp.float32) * 0.1,
        "seg_emb": jax.random.normal(ks[1], (n_seg, H), jnp.float32) * 0.1,
        "w_enc":   jax.random.normal(ks[2], (H, H), jnp.float32) * 0.1,
        "b_enc":   jax.random.normal(ks[3], (H,), jnp.float32) * 0.1,
        "w_pool":  jax.random.normal(ks[4], (H, H), jnp.float32) * 0.1,
        "b_pool":  jax.random.normal(ks[5], (H,), jnp.float32) * 0.1,
    }

    # Module parameters, initialized like init_weights(initrange=0.2).
    # (PyTorch Linear weight is (out, in); we keep the (in, out) transpose.)
    w_tag = jax.random.uniform(ks[6], (H, tagset_size), jnp.float32, -0.2, 0.2)
    b_tag = jax.random.uniform(ks[7], (tagset_size,), jnp.float32, -0.2, 0.2)
    w_cls = jax.random.uniform(ks[8], (H, class_size), jnp.float32, -0.2, 0.2)
    b_cls = jax.random.uniform(ks[9], (class_size,), jnp.float32, -0.2, 0.2)

    # Inputs: subword tokens, segments, attention mask.
    tokens = jax.random.randint(ks[10], (B, T), 1, vocab, jnp.int32)
    segments = jnp.zeros((B, T), jnp.int32)
    attention_mask = jnp.array(
        [[1] * T, [1] * (lengths[1] + 2) + [0] * (T - lengths[1] - 2)],
        dtype=jnp.int32)

    # selects: flattened (B*T) positions of word-initial subtokens (skip CLS);
    # copies:  flattened (B*L) destination rows.
    selects = jnp.array(
        [0 * T + 1 + i for i in range(lengths[0])]
        + [1 * T + 1 + i for i in range(lengths[1])], dtype=jnp.int32)
    copies = jnp.array(
        [0 * L + i for i in range(lengths[0])]
        + [1 * L + i for i in range(lengths[1])], dtype=jnp.int32)

    # "pretrained_model(tokens, token_type_ids=segments, attention_mask=...)"
    top_hiddens, cls_hidden = standin_pretrained_model(
        tokens, segments, attention_mask, pm)

    # Hoisted once (static weights reused across forwards).
    head = prepare_fused_head(w_tag, b_tag, w_cls, b_cls)

    # tm=8 keeps the toy problem on a multi-step grid (2 word blocks + 1 CLS
    # block) to exercise the tiling and both kernel branches.
    tag_scores, class_scores = joint_slot_intent_forward(
        top_hiddens, cls_hidden, selects, copies, lengths, head, tm=8)
    jax.block_until_ready((tag_scores, class_scores))

    # Validate against pure-JAX reference of the same math.
    ref_tag, ref_cls = reference_heads(
        top_hiddens, cls_hidden, selects, copies, lengths,
        w_tag, b_tag, w_cls, b_cls)
    assert tag_scores.shape == (B, L, tagset_size)
    assert class_scores.shape == (B, class_size)
    assert jnp.allclose(tag_scores, ref_tag, atol=1e-4, rtol=1e-4)
    assert jnp.allclose(class_scores, ref_cls, atol=1e-4, rtol=1e-4)

    print("KERNEL_OK")
</pallas_src>

<mosaic_0001>
module attributes {stable_mosaic.version = 11 : i64} {
  func.func @fused_joint_head_kernel(%arg0: i32, %arg1: memref<24xi32, #tpu.memory_space<smem>>, %arg2: memref<8x1xf32, #tpu.memory_space<vmem>>, %arg3: memref<20x64xf32, #tpu.memory_space<any>>, %arg4: memref<2x64xf32, #tpu.memory_space<any>>, %arg5: memref<64x128xbf16, #tpu.memory_space<vmem>>, %arg6: memref<1x128xf32, #tpu.memory_space<vmem>>, %arg7: memref<2x128xf32, #tpu.memory_space<vmem>>, %arg8: memref<8x128xf32, #tpu.memory_space<vmem>>, %arg9: memref<8x64xf32, #tpu.memory_space<vmem>>, %arg10: memref<!tpu.dma_semaphore, #tpu.memory_space<semaphore_mem>>) attributes {dimension_semantics = [#tpu.dimension_semantics<parallel>], iteration_bounds = array<i64: 3>, scalar_prefetch = 1 : i64, scratch_operands = 2 : i64, tpu.core_type = #tpu.core_type<tc>, window_params = [{transform_indices = @transform_0, window_bounds = array<i64: 8, 1>}, {}, {}, {pipeline_mode = #tpu.pipeline_mode<synchronous>, transform_indices = @transform_3, window_bounds = array<i64: 64, 128>}, {pipeline_mode = #tpu.pipeline_mode<synchronous>, transform_indices = @transform_4, window_bounds = array<i64: 1, 128>}, {pipeline_mode = #tpu.pipeline_mode<synchronous>, transform_indices = @transform_5, window_bounds = array<i64: 2, 128>}, {transform_indices = @transform_6, window_bounds = array<i64: 8, 128>}]} {
    %c8_i32 = arith.constant 8 : i32
    %0 = arith.muli %arg0, %c8_i32 : i32
    %c2_i32 = arith.constant 2 : i32
    %1 = arith.cmpi sge, %arg0, %c2_i32 : i32
    %2 = arith.extui %1 : i1 to i32
    %c0_i32 = arith.constant 0 : i32
    %3 = arith.cmpi ne, %2, %c0_i32 : i32
    scf.if %3 {
      %c0_i32_17 = arith.constant 0 : i32
      %c8_i32_18 = arith.constant 8 : i32
      %35 = arith.addi %c0_i32_17, %c8_i32_18 : i32
      %c1_i32_19 = arith.constant 1 : i32
      scf.for %arg11 = %c0_i32_17 to %35 step %c1_i32_19  : i32 {
        %36 = arith.addi %0, %arg11 : i32
        %37 = arith.index_cast %36 : i32 to index
        %38 = memref.load %arg1[%37] : memref<24xi32, #tpu.memory_space<smem>>
        %c0_i32_21 = arith.constant 0 : i32
        %39 = arith.maxsi %38, %c0_i32_21 : i32
        %c0_i32_22 = arith.constant 0 : i32
        %40 = tpu.memref_slice %arg4[%39, %c0_i32_22] : memref<2x64xf32, #tpu.memory_space<any>> -> memref<1x64xf32, #tpu.memory_space<any>>
        %c0_i32_23 = arith.constant 0 : i32
        %41 = tpu.memref_slice %arg9[%arg11, %c0_i32_23] : memref<8x64xf32, #tpu.memory_space<vmem>> -> memref<1x64xf32, #tpu.memory_space<vmem>>
        tpu.enqueue_dma source(%40 : memref<1x64xf32, #tpu.memory_space<any>>) target(%41 : memref<1x64xf32, #tpu.memory_space<vmem>>) target_semaphore(%arg10 : memref<!tpu.dma_semaphore, #tpu.memory_space<semaphore_mem>>)
      }
      %c8_i32_20 = arith.constant 8 : i32
    } else {
    }
    %true = arith.constant true
    %4 = arith.xori %1, %true : i1
    %5 = arith.extui %4 : i1 to i32
    %c0_i32_0 = arith.constant 0 : i32
    %6 = arith.cmpi ne, %5, %c0_i32_0 : i32
    scf.if %6 {
      %c0_i32_17 = arith.constant 0 : i32
      %c8_i32_18 = arith.constant 8 : i32
      %35 = arith.addi %c0_i32_17, %c8_i32_18 : i32
      %c1_i32_19 = arith.constant 1 : i32
      scf.for %arg11 = %c0_i32_17 to %35 step %c1_i32_19  : i32 {
        %36 = arith.addi %0, %arg11 : i32
        %37 = arith.index_cast %36 : i32 to index
        %38 = memref.load %arg1[%37] : memref<24xi32, #tpu.memory_space<smem>>
        %c0_i32_21 = arith.constant 0 : i32
        %39 = arith.maxsi %38, %c0_i32_21 : i32
        %c0_i32_22 = arith.constant 0 : i32
        %40 = tpu.memref_slice %arg3[%39, %c0_i32_22] : memref<20x64xf32, #tpu.memory_space<any>> -> memref<1x64xf32, #tpu.memory_space<any>>
        %c0_i32_23 = arith.constant 0 : i32
        %41 = tpu.memref_slice %arg9[%arg11, %c0_i32_23] : memref<8x64xf32, #tpu.memory_space<vmem>> -> memref<1x64xf32, #tpu.memory_space<vmem>>
        tpu.enqueue_dma source(%40 : memref<1x64xf32, #tpu.memory_space<any>>) target(%41 : memref<1x64xf32, #tpu.memory_space<vmem>>) target_semaphore(%arg10 : memref<!tpu.dma_semaphore, #tpu.memory_space<semaphore_mem>>)
      }
      %c8_i32_20 = arith.constant 8 : i32
    } else {
    }
    %c0_i32_1 = arith.constant 0 : i32
    %c8_i32_2 = arith.constant 8 : i32
    %7 = arith.addi %c0_i32_1, %c8_i32_2 : i32
    %c1_i32 = arith.constant 1 : i32
    scf.for %arg11 = %c0_i32_1 to %7 step %c1_i32  : i32 {
      %c0_i32_17 = arith.constant 0 : i32
      %c0_i32_18 = arith.constant 0 : i32
      %35 = tpu.memref_slice %arg3[%c0_i32_17, %c0_i32_18] : memref<20x64xf32, #tpu.memory_space<any>> -> memref<1x64xf32, #tpu.memory_space<any>>
      %c0_i32_19 = arith.constant 0 : i32
      %c0_i32_20 = arith.constant 0 : i32
      %36 = tpu.memref_slice %arg9[%c0_i32_19, %c0_i32_20] : memref<8x64xf32, #tpu.memory_space<vmem>> -> memref<1x64xf32, #tpu.memory_space<vmem>>
      tpu.wait_dma2 semaphore(%arg10 : memref<!tpu.dma_semaphore, #tpu.memory_space<semaphore_mem>>) src(%35 : memref<1x64xf32, #tpu.memory_space<any>>) dst(%36 : memref<1x64xf32, #tpu.memory_space<vmem>>)
    }
    %c0 = arith.constant 0 : index
    %c0_3 = arith.constant 0 : index
    %8 = vector.load %arg9[%c0, %c0_3] : memref<8x64xf32, #tpu.memory_space<vmem>>, vector<8x64xf32>
    %c0_4 = arith.constant 0 : index
    %c0_5 = arith.constant 0 : index
    %9 = vector.load %arg2[%c0_4, %c0_5] : memref<8x1xf32, #tpu.memory_space<vmem>>, vector<8x1xf32>
    %10 = vector.broadcast %9 : vector<8x1xf32> to vector<8x64xf32>
    %11 = arith.mulf %8, %10 : vector<8x64xf32>
    %12 = arith.truncf %11 : vector<8x64xf32> to vector<8x64xbf16>
    %c0_6 = arith.constant 0 : index
    %c0_7 = arith.constant 0 : index
    %13 = vector.load %arg5[%c0_6, %c0_7] : memref<64x128xbf16, #tpu.memory_space<vmem>>, vector<64x128xbf16>
    %cst = arith.constant dense<0.000000e+00> : vector<8x128xf32>
    %14 = tpu.matmul %12, %13, %cst {dimension_numbers = #tpu.dot_dimension_numbers<[1], [0], [0], [1], [0, 0, 1, 1], [], []>} : vector<8x64xbf16>, vector<64x128xbf16>, vector<8x128xf32> -> vector<8x128xf32>
    %c0_8 = arith.constant 0 : index
    %c0_9 = arith.constant 0 : index
    %15 = vector.load %arg6[%c0_8, %c0_9] : memref<1x128xf32, #tpu.memory_space<vmem>>, vector<1x128xf32>
    %16 = vector.broadcast %15 : vector<1x128xf32> to vector<8x128xf32>
    %17 = arith.addf %14, %16 : vector<8x128xf32>
    %c1 = arith.constant 1 : index
    %c0_10 = arith.constant 0 : index
    %18 = vector.load %arg7[%c1, %c0_10] : memref<2x128xf32, #tpu.memory_space<vmem>>, vector<1x128xf32>
    %c0_11 = arith.constant 0 : index
    %c0_12 = arith.constant 0 : index
    %19 = vector.load %arg7[%c0_11, %c0_12] : memref<2x128xf32, #tpu.memory_space<vmem>>, vector<1x128xf32>
    %20 = arith.select %1, %18, %19 : vector<1x128xf32>
    %21 = vector.broadcast %20 : vector<1x128xf32> to vector<8x128xf32>
    %22 = arith.addf %17, %21 : vector<8x128xf32>
    %cst_13 = arith.constant dense<0xFF800000> : vector<8xf32>
    %23 = vector.multi_reduction <maximumf>, %22, %cst_13 [1] : vector<8x128xf32> to vector<8xf32>
    %24 = vector.shape_cast %23 : vector<8xf32> to vector<8x1xf32>
    %25 = vector.broadcast %24 : vector<8x1xf32> to vector<8x128xf32>
    %26 = arith.subf %22, %25 : vector<8x128xf32>
    %27 = math.exp %26 : vector<8x128xf32>
    %cst_14 = arith.constant dense<0.000000e+00> : vector<8xf32>
    %28 = vector.multi_reduction <add>, %27, %cst_14 [1] : vector<8x128xf32> to vector<8xf32>
    %29 = vector.shape_cast %28 : vector<8xf32> to vector<8x1xf32>
    %30 = math.log %29 : vector<8x1xf32>
    %31 = arith.addf %24, %30 : vector<8x1xf32>
    %32 = vector.broadcast %31 : vector<8x1xf32> to vector<8x128xf32>
    %33 = arith.subf %22, %32 : vector<8x128xf32>
    %c0_15 = arith.constant 0 : index
    %c0_16 = arith.constant 0 : index
    %34 = vector.load %arg8[%c0_15, %c0_16] : memref<8x128xf32, #tpu.memory_space<vmem>>, vector<8x128xf32>
    tpu.vector_store %arg8[%c0_15, %c0_16], %33 {strides = array<i32>} : memref<8x128xf32, #tpu.memory_space<vmem>>, vector<8x128xf32>,
    return
  }
  func.func @transform_0(%arg0: i32, %arg1: memref<24xi32, #tpu.memory_space<smem>>) -> (i32, i32) {
    %c0_i32 = arith.constant 0 : i32
    %c0_i32_0 = arith.constant 0 : i32
    return %arg0, %c0_i32 : i32, i32
  }
  func.func @transform_3(%arg0: i32, %arg1: memref<24xi32, #tpu.memory_space<smem>>) -> (i32, i32) {
    %c0_i32 = arith.constant 0 : i32
    %c0_i32_0 = arith.constant 0 : i32
    %c0_i32_1 = arith.constant 0 : i32
    return %c0_i32, %c0_i32_0 : i32, i32
  }
  func.func @transform_4(%arg0: i32, %arg1: memref<24xi32, #tpu.memory_space<smem>>) -> (i32, i32) {
    %c0_i32 = arith.constant 0 : i32
    %c0_i32_0 = arith.constant 0 : i32
    %c0_i32_1 = arith.constant 0 : i32
    return %c0_i32, %c0_i32_0 : i32, i32
  }
  func.func @transform_5(%arg0: i32, %arg1: memref<24xi32, #tpu.memory_space<smem>>) -> (i32, i32) {
    %c0_i32 = arith.constant 0 : i32
    %c0_i32_0 = arith.constant 0 : i32
    %c0_i32_1 = arith.constant 0 : i32
    return %c0_i32, %c0_i32_0 : i32, i32
  }
  func.func @transform_6(%arg0: i32, %arg1: memref<24xi32, #tpu.memory_space<smem>>) -> (i32, i32) {
    %c0_i32 = arith.constant 0 : i32
    %c0_i32_0 = arith.constant 0 : i32
    return %arg0, %c0_i32 : i32, i32
  }
}

</mosaic_0001>

<llo_original>
// kernel: tpu_custom_call.1
$region0: #{tpu_custom_call.1}
  #allocation0 [shape = 'u32[]', space=smem, size = 0x4, offset = 0x4, fixed_abs, tag = 'smem constant byte address 0x4 - core index']
  #allocation1 [shape = 'u32[144,128]{1,0:T(1,128)}', space=vmem, size = 0x12000, scoped, tag = 'internal scratch']
  #allocation2 [shape = 'f32[8,64]{1,0:T(8,128)}', space=vmem, size = 0x1000, scoped, tag = 'scratch operand']
  #allocation3 [shape = 's32[1]{0}', space=sflag, size = 0x4, scoped, tag = 'scratch operand']
  #allocation4 [shape = 's32[1]{0}', space=sflag, size = 0x4, scoped, tag = 'scoped memory for tpu_custom_call.1']
  #allocation5 [shape = 'u8[512]{0}', space=smem, size = 0x200, scoped, tag = 'prefetched SMEM operand 0']
  #allocation8 [shape = 's32[]', space=sflag, size = 0x4, offset = 0, fixed_abs, tag = 'sflag constant byte address 0x0 - dummy sync flag']
  #allocation9 [shape = 's32[]', space=sflag, size = 0x4, offset = 0, fixed_abs, tag = 'sflag constant byte address 0x0 - dummy sync flag']
  #allocation10 [shape = 's32[]', space=sflag, size = 0x4, offset = 0, fixed_abs, tag = 'sflag constant byte address 0x0 - dummy sync flag']
  #allocation11 [shape = 'u32[]', space=smem, size = 0x4, offset = 0x44, fixed_abs, tag = 'smem constant byte address 0x44 - assertion arg 0']
  #allocation12 [shape = 'u32[]', space=smem, size = 0x4, offset = 0x48, fixed_abs, tag = 'smem constant byte address 0x48 - assertion arg 1']
  %s0 = inlined_call_operand.vmem [shape: s32[24], index: 0, kind: input, shape index: {}]
  %s1 = inlined_call_operand.vmem [shape: f32[24,1], index: 1, kind: input, shape index: {}]
  %s2 = inlined_call_operand.hbm [shape: f32[20,64], index: 2, kind: input, shape index: {}]
  %s3 = inlined_call_operand.vmem [shape: f32[2,64], index: 3, kind: input, shape index: {}]
  %s4 = inlined_call_operand.vmem [shape: bf16[64,128], index: 4, kind: input, shape index: {}]
  %s5 = inlined_call_operand.vmem [shape: f32[1,128], index: 5, kind: input, shape index: {}]
  %s6 = inlined_call_operand.vmem [shape: f32[2,128], index: 6, kind: input, shape index: {}]
  %s7 = inlined_call_operand.hbm [shape: f32[24,128], index: 7, kind: output, shape index: {}]
  %s8 = sld [smem:[#allocation0]]
  $region112: #{tpu_custom_call.1} parent=0
    _
  %s10 = ssub.s32 1, %s8
  %s11 = scalar_select 0, %s10, %s8
  %s12 = sshll.u32 %s0, 4
  %s13 = int_to_ptr.vmem [resolvable:$true] %s12
  %15 = dma.vmem_to_smem %s13, 16, [#allocation5], [#allocation4]
  %16 = dma.done [#allocation4], 16
  %17 = sfence
  $region1: #{tpu_custom_call.1} parent=0
    #allocation6 [shape = 'u8[8192]{0}', space=vmem, size = 0x2000, scoped, tag = 'output window, operand 0']
    #allocation7 [shape = 's32[2]{0}', space=sflag, size = 0x8, scoped, tag = 'scoped memory for tpu_custom_call.1']
    %18 = vsyncpa [#allocation7], 0
    %s19 = scalar_lea.sflag [#allocation7], 1
    %20 = vsyncpa %s19, 0
    loop: start=0, step=1, limit=5
    $region2: #{tpu_custom_call.1} parent=1 // loop_pre_header
      _
    $region3: #{tpu_custom_call.1} parent=1 // loop_header
      %s22 = sphi 0, %s26
      %p23 = scmp.ge.s32.totalorder %s22, 5
      %s32 = sphi 0, %s34
      %s35 = sphi 0, %s32
      %s36 = sphi 0, %s35
      %s52 = sphi 0, %s36
      %s56 = sphi 0, %s56
      %s58 = sphi 0, %s56
      %s59 = sphi 0, %s58
      %s73 = sphi 0, %s59
      %s77 = sphi 0, %s77
      %s79 = sphi 0, %s77
      %s80 = sphi 0, %s79
      %s94 = sphi 0, %s80
      %s98 = sphi 0, %s98
      %s100 = sphi 0, %s98
      %s101 = sphi 0, %s100
      %s115 = sphi 0, %s101
      %s121 = sphi 0, %s123
      %s124 = sphi 0, %s121
      %s125 = sphi 0, %s124
      %s141 = sphi 0, %s125
    $region4: #{tpu_custom_call.1} parent=1 // loop_header_branch
      %25 = sbr.rel (%p23) target = $region8
    $region5: #{tpu_custom_call.1} parent=1 // loop_body
      %s27 = ssub.s32 %s22, 1
      %s28 = ssub.s32 %s22, 2
      %s29 = sadd.s32 %s22, 1
      %s30 = ssub.s32 %s22, %s29
      %p31 = scmp.eq.s32.totalorder %s30, 0
      %s33 = sadd.s32 %s32, 1
      %s34 = scalar_select %p31, %s32, %s33
      %p37 = pneg %p31
      %p38 = scmp.eq.s32.totalorder %s22, 2
      %p39 = por %p37, %p38
      %p40 = scmp.ne.s32.totalorder %s32, %s35
      %p41 = scmp.eq.s32.totalorder %s22, 0
      %p42 = por %p40, %p41
      %p43 = scmp.ne.s32.totalorder %s32, %s35
      %p44 = scmp.eq.s32.totalorder %s27, 2
      %p45 = por %p43, %p44
      %p46 = scmp.ne.s32.totalorder %s35, %s36
      %p47 = scmp.eq.s32.totalorder %s27, 0
      %p48 = por %p46, %p47
      %p49 = scmp.ne.s32.totalorder %s35, %s36
      %p50 = scmp.eq.s32.totalorder %s28, 2
      %p51 = por %p49, %p50
      %p53 = scmp.ne.s32.totalorder %s36, %s52
      %p54 = scmp.eq.s32.totalorder %s28, 0
      %p55 = por %p53, %p54
      %s57 = sadd.s32 %s56, 1
      %p60 = scmp.eq.s32.totalorder %s22, 2
      %p61 = scmp.ne.s32.totalorder %s56, %s58
      %p62 = scmp.eq.s32.totalorder %s22, 0
      %p63 = por %p61, %p62
      %p64 = scmp.ne.s32.totalorder %s56, %s58
      %p65 = scmp.eq.s32.totalorder %s27, 2
      %p66 = por %p64, %p65
      %p67 = scmp.ne.s32.totalorder %s58, %s59
      %p68 = scmp.eq.s32.totalorder %s27, 0
      %p69 = por %p67, %p68
      %p70 = scmp.ne.s32.totalorder %s58, %s59
      %p71 = scmp.eq.s32.totalorder %s28, 2
      %p72 = por %p70, %p71
      %p74 = scmp.ne.s32.totalorder %s59, %s73
      %p75 = scmp.eq.s32.totalorder %s28, 0
      %p76 = por %p74, %p75
      %s78 = sadd.s32 %s77, 1
      %p81 = scmp.eq.s32.totalorder %s22, 2
      %p82 = scmp.ne.s32.totalorder %s77, %s79
      %p83 = scmp.eq.s32.totalorder %s22, 0
      %p84 = por %p82, %p83
      %p85 = scmp.ne.s32.totalorder %s77, %s79
      %p86 = scmp.eq.s32.totalorder %s27, 2
      %p87 = por %p85, %p86
      %p88 = scmp.ne.s32.totalorder %s79, %s80
      %p89 = scmp.eq.s32.totalorder %s27, 0
      %p90 = por %p88, %p89
      %p91 = scmp.ne.s32.totalorder %s79, %s80
      %p92 = scmp.eq.s32.totalorder %s28, 2
      %p93 = por %p91, %p92
      %p95 = scmp.ne.s32.totalorder %s80, %s94
      %p96 = scmp.eq.s32.totalorder %s28, 0
      %p97 = por %p95, %p96
      %s99 = sadd.s32 %s98, 1
      %p102 = scmp.eq.s32.totalorder %s22, 2
      %p103 = scmp.ne.s32.totalorder %s98, %s100
      %p104 = scmp.eq.s32.totalorder %s22, 0
      %p105 = por %p103, %p104
      %p106 = scmp.ne.s32.totalorder %s98, %s100
      %p107 = scmp.eq.s32.totalorder %s27, 2
      %p108 = por %p106, %p107
      %p109 = scmp.ne.s32.totalorder %s100, %s101
      %p110 = scmp.eq.s32.totalorder %s27, 0
      %p111 = por %p109, %p110
      %p112 = scmp.ne.s32.totalorder %s100, %s101
      %p113 = scmp.eq.s32.totalorder %s28, 2
      %p114 = por %p112, %p113
      %p116 = scmp.ne.s32.totalorder %s101, %s115
      %p117 = scmp.eq.s32.totalorder %s28, 0
      %p118 = por %p116, %p117
      %s119 = ssub.s32 %s22, %s29
      %p120 = scmp.eq.s32.totalorder %s119, 0
      %s122 = sadd.s32 %s121, 1
      %s123 = scalar_select %p120, %s121, %s122
      %p126 = pneg %p120
      %p127 = scmp.eq.s32.totalorder %s22, 2
      %p128 = por %p126, %p127
      %p129 = scmp.ne.s32.totalorder %s121, %s124
      %p130 = scmp.eq.s32.totalorder %s22, 0
      %p131 = por %p129, %p130
      %p132 = scmp.ne.s32.totalorder %s121, %s124
      %p133 = scmp.eq.s32.totalorder %s27, 2
      %p134 = por %p132, %p133
      %p135 = scmp.ne.s32.totalorder %s124, %s125
      %p136 = scmp.eq.s32.totalorder %s27, 0
      %p137 = por %p135, %p136
      %p138 = scmp.ne.s32.totalorder %s124, %s125
      %p139 = scmp.eq.s32.totalorder %s28, 2
      %p140 = por %p138, %p139
      %p142 = scmp.ne.s32.totalorder %s125, %s141
      %p143 = scmp.eq.s32.totalorder %s28, 0
      %p144 = por %p142, %p143
      %p145 = scmp.le.s32.totalorder 1, %s22
      %p146 = scmp.lt.s32.totalorder %s22, 4
      %p147 = pnand %p145, %p146
      %p148 = pneg %p147
      // Predicated region
      $region9: #{tpu_custom_call.1} parent=5 // pred_check
        _
      $region10: #{tpu_custom_call.1} parent=5 // pred_check_branch
        %150 = sbr.rel (%p147) target = $region12
      $region11: #{tpu_custom_call.1} parent=5 // pred_region
        %s151 = ssub.s32 %s22, 1
        // Predicated region
        $region13: #{tpu_custom_call.1} parent=11 // pred_check
          %p152 = pneg %p69
        $region14: #{tpu_custom_call.1} parent=11 // pred_check_branch
          %154 = sbr.rel (%p152) target = $region16
        $region15: #{tpu_custom_call.1} parent=11 // pred_region
          _
        $region16: #{tpu_custom_call.1} parent=11 // pred_fallthru
          _
        // Predicated region
        $region17: #{tpu_custom_call.1} parent=11 // pred_check
          %p155 = pneg %p90
        $region18: #{tpu_custom_call.1} parent=11 // pred_check_branch
          %157 = sbr.rel (%p155) target = $region20
        $region19: #{tpu_custom_call.1} parent=11 // pred_region
          _
        $region20: #{tpu_custom_call.1} parent=11 // pred_fallthru
          _
        // Predicated region
        $region21: #{tpu_custom_call.1} parent=11 // pred_check
          %p158 = pneg %p111
        $region22: #{tpu_custom_call.1} parent=11 // pred_check_branch
          %160 = sbr.rel (%p158) target = $region24
        $region23: #{tpu_custom_call.1} parent=11 // pred_region
          _
        $region24: #{tpu_custom_call.1} parent=11 // pred_fallthru
          _
      $region12: #{tpu_custom_call.1} parent=5 // pred_fallthru
        _
      %p161 = scmp.lt.s32.totalorder %s22, 3
      // Predicated region
      $region25: #{tpu_custom_call.1} parent=5 // pred_check
        %p162 = pneg %p161
      $region26: #{tpu_custom_call.1} parent=5 // pred_check_branch
        %164 = sbr.rel (%p162) target = $region28
      $region27: #{tpu_custom_call.1} parent=5 // pred_region
        // Predicated region
        $region29: #{tpu_custom_call.1} parent=27 // pred_check
          %p165 = pneg %p42
        $region30: #{tpu_custom_call.1} parent=27 // pred_check_branch
          %167 = sbr.rel (%p165) target = $region32
        $region31: #{tpu_custom_call.1} parent=27 // pred_region
          %p168 = scmp.lt.s32.totalorder %s22, 2
          %s169 = scalar_select %p168, %s22, 2
          %s170 = smul.addr %s169, 8
          %s171 = scalar_lea.vmem %s1, %s170
        $region32: #{tpu_custom_call.1} parent=27 // pred_fallthru
          _
      $region28: #{tpu_custom_call.1} parent=5 // pred_fallthru
        _
      %p172 = scmp.le.s32.totalorder 1, %s22
      %p173 = scmp.lt.s32.totalorder %s22, 4
      %p174 = pnand %p172, %p173
      %p175 = pneg %p174
      // Predicated region
      $region33: #{tpu_custom_call.1} parent=5 // pred_check
        _
      $region34: #{tpu_custom_call.1} parent=5 // pred_check_branch
        %177 = sbr.rel (%p174) target = $region36
      $region35: #{tpu_custom_call.1} parent=5 // pred_region
        %s178 = ssub.s32 %s22, 1
        %p179 = scmp.lt.s32.totalorder %s27, 2
        %s180 = scalar_select %p179, %s27, 2
        %s181 = smul.addr %s180, 8
        %s182 = scalar_lea.vmem %s1, %s181
        %p183 = pneg %p48
        %p184 = pneg %p45
        %p185 = pneg %p69
        %p186 = pneg %p66
        %p187 = pneg %p90
        %p188 = pneg %p87
        %p189 = pneg %p111
        %p190 = pneg %p108
        %p191 = pneg %p137
        %p192 = pneg %p134
        %s193 = sand.u32 %s124, 1
        %s194 = scalar_lea.sflag [#allocation7], %s193
        %s195 = sand.u32 %s124, 1
        %s196 = smul.addr %s195, 8
        %s197 = scalar_lea.vmem [#allocation6], %s196
        %p198 = scmp.lt.s32.totalorder %s27, 2
        %s199 = scalar_select %p198, %s27, 2
        %s200 = smul.addr %s199, 8
        %s201 = scalar_lea.vmem %s1, %s200
        %s203 = smul.u32 %s27, 8
        %p204 = scmp.ge.s32.totalorder %s27, 2
        // Predicated region
        $region37: #{tpu_custom_call.1} parent=35 // pred_check
          %p205 = pneg %p204
        $region38: #{tpu_custom_call.1} parent=35 // pred_check_branch
          %207 = sbr.rel (%p205) target = $region40
        $region39: #{tpu_custom_call.1} parent=35 // pred_region
          loop: start=0, step=1, limit=8
          $region41: #{tpu_custom_call.1} parent=39 // loop_pre_header
            _
          $region42: #{tpu_custom_call.1} parent=39 // loop_header
            %s209 = sphi 0, %s213
            %p210 = scmp.ge.s32.totalorder %s209, 8
          $region43: #{tpu_custom_call.1} parent=39 // loop_header_branch
            %212 = sbr.rel (%p210) target = $region47
          $region44: #{tpu_custom_call.1} parent=39 // loop_body
            %s214 = sadd.s32 %s203, %s209
            %s215 = sld [smem:[#allocation5 + %s214]]
            %p216 = scmp.gt.s32.totalorder %s215, 0
            %s217 = scalar_select %p216, %s215, 0
            %s218 = scalar_lea.vmem %s3, %s217
            %s219 = scalar_lea.vmem [#allocation2], %s209
            %p221 = scmp.lt.u32.totalorder 1, 8
            %p222 = pneg %p221
            // Predicated region
            $region48: #{tpu_custom_call.1} parent=44 // pred_check
              _
            $region49: #{tpu_custom_call.1} parent=44 // pred_check_branch
              %224 = sbr.rel (%p221) target = $region51
            $region50: #{tpu_custom_call.1} parent=44 // pred_region
              %s239 = sand.u32 1, 7
              %p240 = scmp.eq.s32.totalorder %s239, 0
              %p241 = pneg %p240
              // Predicated region
              $region63: #{tpu_custom_call.1} parent=50 // pred_check
                _
              $region64: #{tpu_custom_call.1} parent=50 // pred_check_branch
                %243 = sbr.rel (%p240) target = $region66
              $region65: #{tpu_custom_call.1} parent=50 // pred_region
                %s244 = sand.u32 1, 7
                %s245 = ssub.s32 1, %s244
                %s246 = scalar_lea.vmem %s218, %s245
                %s247 = ssub.s32 1, %s244
                %s248 = scalar_lea.vmem %s219, %s247 [#allocation2]
                %s249 = sshllo.u32 0, %s244
                loop: start=0, step=1, limit=1
                $region67: #{tpu_custom_call.1} parent=65 // loop_pre_header
                  _
                $region68: #{tpu_custom_call.1} parent=65 // loop_header
                  %s251 = sphi 0, %s255
                  %p252 = scmp.ge.s32.totalorder %s251, 1
                  %s256 = sphi %s246, %s246
                  %s257 = sphi %s248, %s248
                $region69: #{tpu_custom_call.1} parent=65 // loop_header_branch
                  %254 = sbr.rel (%p252) target = $region73
                $region70: #{tpu_custom_call.1} parent=65 // loop_body
                  %v258 = vld [vmem:[%s256] sm:%s249]
                  %259 = vst [vmem:[%s257] sm:%s249] %v258
                $region71: #{tpu_custom_call.1} parent=65 // loop_footer
                  %s255 = sadd.s32 1, %s251
                $region72: #{tpu_custom_call.1} parent=65 // loop_footer_branch
                  %250 = sbr.rel target = $region68
                $region73: #{tpu_custom_call.1} parent=65 // loop_exit
                  _
              $region66: #{tpu_custom_call.1} parent=50 // pred_fallthru
                _
            $region51: #{tpu_custom_call.1} parent=44 // pred_fallthru
              _
            // Predicated region
            $region52: #{tpu_custom_call.1} parent=44 // pred_check
              %p225 = pneg %p221
            $region53: #{tpu_custom_call.1} parent=44 // pred_check_branch
              %227 = sbr.rel (%p225) target = $region55
            $region54: #{tpu_custom_call.1} parent=44 // pred_region
              %s228 = sshllo.u32 0, 1
              loop: start=0, step=1, limit=1
              $region56: #{tpu_custom_call.1} parent=54 // loop_pre_header
                _
              $region57: #{tpu_custom_call.1} parent=54 // loop_header
                %s230 = sphi 0, %s234
                %p231 = scmp.ge.s32.totalorder %s230, 1
                %s235 = sphi %s218, %s218
                %s236 = sphi %s219, %s219
              $region58: #{tpu_custom_call.1} parent=54 // loop_header_branch
                %233 = sbr.rel (%p231) target = $region62
              $region59: #{tpu_custom_call.1} parent=54 // loop_body
                %v237 = vld [vmem:[%s235] sm:%s228]
                %238 = vst [vmem:[%s236] sm:%s228] %v237
              $region60: #{tpu_custom_call.1} parent=54 // loop_footer
                %s234 = sadd.s32 1, %s230
              $region61: #{tpu_custom_call.1} parent=54 // loop_footer_branch
                %229 = sbr.rel target = $region57
              $region62: #{tpu_custom_call.1} parent=54 // loop_exit
                _
            $region55: #{tpu_custom_call.1} parent=44 // pred_fallthru
              _
            // Predicated region
            $region74: #{tpu_custom_call.1} parent=44 // pred_check
              _
            $region75: #{tpu_custom_call.1} parent=44 // pred_check_branch
              %262 = sbr.rel (0) target = $region77
            $region76: #{tpu_custom_call.1} parent=44 // pred_region
              %263 = vsyncadd [#allocation3], 16
            $region77: #{tpu_custom_call.1} parent=44 // pred_fallthru
              _
          $region45: #{tpu_custom_call.1} parent=39 // loop_footer
            %s213 = sadd.s32 1, %s209
          $region46: #{tpu_custom_call.1} parent=39 // loop_footer_branch
            %208 = sbr.rel target = $region42
          $region47: #{tpu_custom_call.1} parent=39 // loop_exit
            _
        $region40: #{tpu_custom_call.1} parent=35 // pred_fallthru
          _
        %p264 = scmp.lt.s32.totalorder %s27, 2
        // Predicated region
        $region78: #{tpu_custom_call.1} parent=35 // pred_check
          %p265 = pneg %p264
        $region79: #{tpu_custom_call.1} parent=35 // pred_check_branch
          %267 = sbr.rel (%p265) target = $region81
        $region80: #{tpu_custom_call.1} parent=35 // pred_region
          loop: start=0, step=1, limit=8
          $region82: #{tpu_custom_call.1} parent=80 // loop_pre_header
            _
          $region83: #{tpu_custom_call.1} parent=80 // loop_header
            %s269 = sphi 0, %s273
            %p270 = scmp.ge.s32.totalorder %s269, 8
          $region84: #{tpu_custom_call.1} parent=80 // loop_header_branch
            %272 = sbr.rel (%p270) target = $region88
          $region85: #{tpu_custom_call.1} parent=80 // loop_body
            %s274 = sadd.s32 %s203, %s269
            %s275 = sld [smem:[#allocation5 + %s274]]
            %p276 = scmp.gt.s32.totalorder %s275, 0
            %s277 = scalar_select %p276, %s275, 0
            %s278 = smul.addr %s277, 16
            %s279 = scalar_lea.hbm %s2, %s278
            %s280 = scalar_lea.vmem [#allocation2], %s269
            // Predicated region
            $region89: #{tpu_custom_call.1} parent=85 // pred_check
              _
            $region90: #{tpu_custom_call.1} parent=85 // pred_check_branch
              %282 = sbr.rel target = $region92
            $region91: #{tpu_custom_call.1} parent=85 // pred_region
              %283 = sst [smem:[#allocation11]] [#allocation10]
              %284 = sst [smem:[#allocation12]] [#allocation9]
            $region92: #{tpu_custom_call.1} parent=85 // pred_fallthru
              _
            %286 = shalt.err (0)
            %s288 = sshll.u32 %s280, 4
            %s289 = int_to_ptr.vmem [resolvable:$true] %s288
            %291 = dma.hbm_to_vmem [thread:$0]  %s279, 16, %s289, [#allocation3]
          $region86: #{tpu_custom_call.1} parent=80 // loop_footer
            %s273 = sadd.s32 1, %s269
          $region87: #{tpu_custom_call.1} parent=80 // loop_footer_branch
            %268 = sbr.rel target = $region83
          $region88: #{tpu_custom_call.1} parent=80 // loop_exit
            _
        $region81: #{tpu_custom_call.1} parent=35 // pred_fallthru
          _
        loop: start=0, step=1, limit=8
        $region93: #{tpu_custom_call.1} parent=35 // loop_pre_header
          _
        $region94: #{tpu_custom_call.1} parent=35 // loop_header
          %s293 = sphi 0, %s297
          %p294 = scmp.ge.s32.totalorder %s293, 8
        $region95: #{tpu_custom_call.1} parent=35 // loop_header_branch
          %296 = sbr.rel (%p294) target = $region99
        $region96: #{tpu_custom_call.1} parent=35 // loop_body
          %s298 = smul.u32 1, 1
          %s299 = sshll.u32 %s298, 4
          %300 = dma.done [#allocation3], %s299
        $region97: #{tpu_custom_call.1} parent=35 // loop_footer
          %s297 = sadd.s32 1, %s293
        $region98: #{tpu_custom_call.1} parent=35 // loop_footer_branch
          %292 = sbr.rel target = $region94
        $region99: #{tpu_custom_call.1} parent=35 // loop_exit
          _
        %v301 = vld [vmem:[#allocation2] sm:$0xff]
        %v302 = vld [vmem:[%s201] sm:$0xff]
        %304 = vset.pattern.permute.xlu0 0
        %305 = vperm.xlu0 %304, %v302
        %v306 = vpop.permute.xlu0 %305
        %v308 = vmul.f32 %v301, %v306
        %v309 = vpack.c.bf16 %v308, %v308
        %v310 = vld [vmem:[%s4] sm:$0xf]
        %v311 = vld [vmem:[%s4 + $0x4] sm:$0xf]
        %v312 = vld [vmem:[%s4 + $0x8] sm:$0xf]
        %v313 = vld [vmem:[%s4 + $0xc] sm:$0xf]
        %v314 = vld [vmem:[%s4 + $0x10] sm:$0xf]
        %v315 = vld [vmem:[%s4 + $0x14] sm:$0xf]
        %v316 = vld [vmem:[%s4 + $0x18] sm:$0xf]
        %v317 = vld [vmem:[%s4 + $0x1c] sm:$0xf]
        %v318 = vld [vmem:[%s5] sm:$0x1]
        %v320 = vlaneseq
        %v321 = vshrl.u32 %v320, 7
        %v322 = vsub.s32 0, %v321
        %v323 = vrot.slane %v318, %v322
        %v333 = vunpack.c.l.b16 %v310
        %v334 = vunpack.c.l.b16 %v311
        %v335 = vunpack.c.l.b16 %v312
        %v336 = vunpack.c.l.b16 %v313
        %v337 = vunpack.c.l.b16 %v314
        %v338 = vunpack.c.l.b16 %v315
        %v339 = vunpack.c.l.b16 %v316
        %v340 = vunpack.c.l.b16 %v317
        %v341 = vpack.c.b16 %v334, %v333
        %v342 = vpack.c.b16 %v336, %v335
        %v343 = vpack.c.b16 %v338, %v337
        %v344 = vpack.c.b16 %v340, %v339
        %vm349 = vcmask 523264
        %v351 = vsel %vm349, %v309, 0
        %353 = vmatprep.subr.bf16.mxu0 0
        %354 = vmatpush1.bf16.msra.mxu0 %v341
        %355 = vmatprep.subr.bf16.mxu0 0
        %356 = vmatpush1.bf16.msra.mxu0 %v342
        %357 = vmatprep.subr.bf16.mxu0 0
        %358 = vmatpush1.bf16.msra.mxu0 %v343
        %359 = vmatprep.subr.bf16.mxu0 0
        %360 = vmatpush1.bf16.msra.mxu0 %v344
        %361 = vmatprep.subr.bf16.mxu0 0
        %362 = vmatpush1.bf16.msra.mxu0 0
        %363 = vmatprep.subr.bf16.mxu0 0
        %364 = vmatpush1.bf16.msra.mxu0 0
        %365 = vmatprep.subr.bf16.mxu0 0
        %366 = vmatpush1.bf16.msra.mxu0 0
        %367 = vmatprep.subr.bf16.mxu0 0
        %368 = vmatpush1.bf16.msra.mxu0 0
        %369 = vmatprep.subr.bf16.mxu0 0
        %370 = vmatpush1.bf16.msra.mxu0 0
        %371 = vmatprep.subr.bf16.mxu0 0
        %372 = vmatpush1.bf16.msra.mxu0 0
        %373 = vmatprep.subr.bf16.mxu0 0
        %374 = vmatpush1.bf16.msra.mxu0 0
        %375 = vmatprep.subr.bf16.mxu0 0
        %376 = vmatpush1.bf16.msra.mxu0 0
        %377 = vmatprep.subr.bf16.mxu0 0
        %378 = vmatpush1.bf16.msra.mxu0 0
        %379 = vmatprep.subr.bf16.mxu0 0
        %380 = vmatpush1.bf16.msra.mxu0 0
        %381 = vmatprep.subr.bf16.mxu0 0
        %382 = vmatpush1.bf16.msra.mxu0 0
        %383 = vmatprep.subr.bf16.mxu0 0
        %384 = vmatpush1.bf16.msra.mxu0 0
        %385 = vmatprep.mubr.bf16.mxu0 0
        %386 = vmatmul.mubr.bf16.gmra.mrb[0].mxu0 %v351
        %v387 = vpop.f32.mrb[0].mxu0
        %v388 = vadd.f32 %v323, %v387
        %v389 = vpop.f32.mrb[0].mxu0
        %v390 = vpop.f32.mrb[0].mxu0
        %v391 = vpop.f32.mrb[0].mxu0
        %392 = vdwg.mxu0
        %v393 = vld [vmem:[%s6 + $0x1] sm:$0x1]
        %v394 = vld [vmem:[%s6] sm:$0x1]
        %s395 = scalar_select %p204, 1, 0
        %v396 = vstv %s395
        %vm397 = vcmp.eq.s32.totalorder %v396, 1
        %v398 = vsel %vm397, %v393, %v394
        %v399 = vlaneseq
        %v400 = vshrl.u32 %v399, 7
        %v401 = vsub.s32 0, %v400
        %v402 = vrot.slane %v398, %v401
        %v403 = vadd.f32 %v388, %v402
        %404 = vmax.xlane.f32.xlu0 %v403
        %v405 = vpop.xlane.xlu0 %404
        %v406 = vsub.f32 %v403, %v405
        %v407 = vmul.f32 %v406, 1.442695
        %v408 = vpow.pop %v407
        %409 = vadd.xlane.f32.xlu0 %v408
        %v410 = vpop.xlane.xlu0 %409
        %v411 = vlog2.pop %v410
        %v412 = vmul.f32 %v411, 0.6931472
        %v413 = vadd.f32 %v405, %v412
        %v414 = vsub.f32 %v403, %v413
        %415 = vst [vmem:[%s197] sm:$0xff] %v414
        %s416 = sand.u32 %s124, 1
        %s417 = scalar_lea.sflag [#allocation7], %s416
        %s418 = sand.u32 %s124, 1
        %s419 = smul.addr %s418, 8
        %s420 = scalar_lea.vmem [#allocation6], %s419
        // Predicated region
        $region100: #{tpu_custom_call.1} parent=35 // pred_check
          %p421 = pneg %p134
        $region101: #{tpu_custom_call.1} parent=35 // pred_check_branch
          %423 = sbr.rel (%p421) target = $region103
        $region102: #{tpu_custom_call.1} parent=35 // pred_region
          %s425 = ssub.s32 128, 128
          %426 = vsyncadd %s417, %s425
          %s427 = smul.addr %s27, 128
          %s428 = scalar_lea.hbm %s7, %s427
          %s430 = sshll.u32 %s420, 4
          %s431 = int_to_ptr.vmem [resolvable:$true] %s430
          %433 = dma.vmem_to_hbm [thread:$0]  %s431, 128, %s428, %s417
        $region103: #{tpu_custom_call.1} parent=35 // pred_fallthru
          _
      $region36: #{tpu_custom_call.1} parent=5 // pred_fallthru
        _
      %p434 = scmp.le.s32.totalorder 2, %s22
      // Predicated region
      $region104: #{tpu_custom_call.1} parent=5 // pred_check
        %p435 = pneg %p434
      $region105: #{tpu_custom_call.1} parent=5 // pred_check_branch
        %437 = sbr.rel (%p435) target = $region107
      $region106: #{tpu_custom_call.1} parent=5 // pred_region
        %s438 = ssub.s32 %s22, 2
        // Predicated region
        $region108: #{tpu_custom_call.1} parent=106 // pred_check
          %p439 = pneg %p140
        $region109: #{tpu_custom_call.1} parent=106 // pred_check_branch
          %441 = sbr.rel (%p439) target = $region111
        $region110: #{tpu_custom_call.1} parent=106 // pred_region
          %s442 = sand.u32 %s125, 1
          %s443 = scalar_lea.sflag [#allocation7], %s442
          %s444 = sand.u32 %s125, 1
          %s445 = smul.addr %s444, 8
          %s446 = scalar_lea.vmem [#allocation6], %s445
          %447 = dma.done %s443, 128
        $region111: #{tpu_custom_call.1} parent=106 // pred_fallthru
          _
      $region107: #{tpu_custom_call.1} parent=5 // pred_fallthru
        _
    $region6: #{tpu_custom_call.1} parent=1 // loop_footer
      %s26 = sadd.s32 1, %s22
    $region7: #{tpu_custom_call.1} parent=1 // loop_footer_branch
      %21 = sbr.rel target = $region3
    $region8: #{tpu_custom_call.1} parent=1 // loop_exit
      _
    %448 = vsyncpa [#allocation7], 1
    %s449 = scalar_lea.sflag [#allocation7], 1
    %450 = vsyncpa %s449, 1
  %451 = vsyncmov [#allocation3]
  %s452 = vpop.sfrf %451
  %p453 = scmp.eq.s32.totalorder %s452, 0
  %p454 = pneg %p453
  %456 = shalt.err (%p454)

</llo_original>
